<compile_context>
chip_gen: v7x
topology: tpu7x:2x2x1
jax: 0.10.0
libtpu: 0.0.40
codegen_flags: <defaults>
</compile_context>

<pallas_src>
import math

import jax
import jax.numpy as jnp
from jax.experimental import pallas as pl
from jax.experimental.pallas import tpu as pltpu


_LANE = 128
# Conservative whole-array-in-VMEM budget for the feature tile: fits v5e's ~16 MiB
# default scoped VMEM (and v6e/v7x) without touching vmem_limit_bytes.
_WHOLE_ARRAY_VMEM_BUDGET = 8 * 1024 * 1024


# ----------------------------------------------------------------------------
# Pallas kernel: fused global-average-pool + nn.Linear head
# ----------------------------------------------------------------------------
def _head_kernel(feat_ref, w_ref, b_ref, o_ref):
    # feat_ref: (Bt, HW, C)   w_ref: (C, Np)   b_ref: (1, Np)   o_ref: (Bt, Np)
    x = feat_ref[...]
    if x.dtype != jnp.float32:
        x = x.astype(jnp.float32)          # widen once on load (v5e VPU has no bf16 math)
    # Global average pool: 1/HW is pre-folded into w_ref, so a bare sum suffices.
    pooled = jnp.sum(x, axis=1)            # (Bt, C) — in-tile reduce, C stays lane-dense
    # Plain (M,K)x(K,N) contraction: weight already transposed at init, so no
    # in-kernel XLU transpose before the MXU push. f32 accumulation on the MXU.
    acc = jax.lax.dot_general(
        pooled,
        w_ref[...],
        dimension_numbers=(((1,), (0,)), ((), ())),
        preferred_element_type=jnp.float32,
    )                                      # (Bt, Np) — lane-dense
    o_ref[...] = (acc + b_ref[...]).astype(o_ref.dtype)


# ----------------------------------------------------------------------------
# Host-side wrappers
# ----------------------------------------------------------------------------
def preprocess_input(x):
    """Mirrors the PyTorch forward's input handling:
       if x.shape[2] == 1: x = x.repeat(1, 1, 3, 1, 1);  x = torch.squeeze(x)
    torch.squeeze drops ALL size-1 dims (including batch at B==1); here we squeeze
    only the known singleton wrapper axis so (B, 3, H, W) survives for any B."""
    if x.ndim == 5 and x.shape[2] == 1:
        x = jnp.repeat(x, 3, axis=2)
    if x.ndim == 5 and x.shape[1] == 1:
        x = jnp.squeeze(x, axis=1)
    return x


def prepare_head_params(weight, bias, hw, lane_tile=_LANE):
    """One-time (init-time, NOT per-forward) fc parameter prep:
       * transpose the PyTorch (N, K) weight to (K, N) so the kernel does a plain
         (M,K)x(K,N) matmul with no in-kernel transpose,
       * fold the 1/HW global-average-pool scale into the weight,
       * zero-pad the class axis up to a lane-dense multiple of 128.

    weight: (num_classes, num_ftrs)  bias: (num_classes,)  hw: Hf*Wf of the feature map.
    """
    n, k = weight.shape
    n_pad = -(-n // lane_tile) * lane_tile
    w_t = (weight.astype(jnp.float32) * (1.0 / hw)).T                      # (K, N)
    w_padded = jnp.zeros((k, n_pad), jnp.float32).at[:, :n].set(w_t)
    b_padded = jnp.zeros((1, n_pad), jnp.float32).at[0, :n].set(bias.astype(jnp.float32))
    return w_padded, b_padded


def resnet_head_forward(features_nhwc, w_padded, b_padded, *, num_classes,
                        feature_dtype=None, batch_block=32):
    """Fused avgpool + fc head of PretrainedResNet.

    features_nhwc : (B, Hf, Wf, C) — channels-last handoff from the frozen backbone
                    (free reshape to (B, HW, C); no host transpose, no batch pad).
    w_padded      : (C, N_pad) — pre-transposed, 1/HW-scaled, lane-padded fc weight.
    b_padded      : (1, N_pad) — lane-padded fc bias.
    feature_dtype : optional narrower dtype (e.g. jnp.bfloat16) for the HBM->VMEM
                    feature transfer; the kernel widens to f32 before accumulating.
    returns       : (B, num_classes) float32
    """
    B, Hf, Wf, C = features_nhwc.shape
    HW = math.prod((Hf, Wf))               # static Python int
    n_pad = w_padded.shape[1]

    feat = features_nhwc.reshape(B, HW, C)  # free: channels-last, no data shuffle
    if feature_dtype is not None and feat.dtype != feature_dtype:
        feat = feat.astype(feature_dtype)

    feat_bytes = B * HW * C * feat.dtype.itemsize
    out_shape = jax.ShapeDtypeStruct((B, n_pad), jnp.float32)

    if feat_bytes <= _WHOLE_ARRAY_VMEM_BUDGET:
        # Small batch: everything resident in VMEM, no grid, zero pipeline overhead.
        out = pl.pallas_call(
            _head_kernel,
            out_shape=out_shape,
            in_specs=[
                pl.BlockSpec(memory_space=pltpu.MemorySpace.VMEM),
                pl.BlockSpec(memory_space=pltpu.MemorySpace.VMEM),
                pl.BlockSpec(memory_space=pltpu.MemorySpace.VMEM),
            ],
            out_specs=pl.BlockSpec(memory_space=pltpu.MemorySpace.VMEM),
        )(feat, w_padded, b_padded)
    else:
        # Large batch: tile over batch. "parallel" shards the axis across v7x's two
        # TensorCores, keeps the working set inside v5e/v7x scoped VMEM, and lets
        # BlockSpec double-buffering hide the HBM feature read.
        tb = max(8, min(batch_block, B))
        tb = -(-tb // 8) * 8
        out = pl.pallas_call(
            _head_kernel,
            out_shape=out_shape,
            grid=(pl.cdiv(B, tb),),
            in_specs=[
                pl.BlockSpec((tb, HW, C), lambda i: (i, 0, 0)),
                pl.BlockSpec((C, n_pad), lambda i: (0, 0)),
                pl.BlockSpec((1, n_pad), lambda i: (0, 0)),
            ],
            out_specs=pl.BlockSpec((tb, n_pad), lambda i: (i, 0)),
            compiler_params=pltpu.CompilerParams(
                dimension_semantics=("parallel",)),
        )(feat, w_padded, b_padded)

    # Drop the lane padding on the class axis (batch was never padded).
    return out[:, :num_classes]


def init_fc_params(key, num_ftrs, num_classes):
    """Deterministic init mirroring nn.Linear defaults (uniform +/- 1/sqrt(fan_in))."""
    kw, kb = jax.random.split(key)
    bound = 1.0 / math.sqrt(num_ftrs)
    weight = jax.random.uniform(kw, (num_classes, num_ftrs), jnp.float32,
                                minval=-bound, maxval=bound)
    bias = jax.random.uniform(kb, (num_classes,), jnp.float32,
                              minval=-bound, maxval=bound)
    return weight, bias


if __name__ == "__main__":
    NUM_CLASSES = 10
    NUM_FTRS = 512          # resnet18 fc.in_features
    B = 2
    Hf = Wf = 7             # canonical resnet18 layer4 spatial size

    key = jax.random.PRNGKey(0)
    kx, kf, kp = jax.random.split(key, 3)

    # Raw module input: grayscale stored as (B, 1, 1, H, W), as the forward implies.
    x_raw = jax.random.normal(kx, (B, 1, 1, 32, 32), dtype=jnp.float32)
    x_rgb = preprocess_input(x_raw)          # repeat to 3 channels + squeeze wrapper axis
    assert x_rgb.shape == (B, 3, 32, 32)

    # TODO(synk): frozen pretrained ResNet-18 backbone not reproducible in-script;
    # `features` stands in for resnet.layer4's (channels-last) output feeding the head.
    features = jax.random.normal(kf, (B, Hf, Wf, NUM_FTRS), dtype=jnp.float32)

    fc_weight, fc_bias = init_fc_params(kp, NUM_FTRS, NUM_CLASSES)
    w_padded, b_padded = prepare_head_params(fc_weight, fc_bias, hw=Hf * Wf)  # once, at init

    # f32 path (exact module numerics).
    y = resnet_head_forward(features, w_padded, b_padded, num_classes=NUM_CLASSES)
    jax.block_until_ready(y)

    # Reference: global avg pool + PyTorch nn.Linear semantics (x @ W^T + b).
    pooled_ref = features.mean(axis=(1, 2))
    y_ref = pooled_ref @ fc_weight.T + fc_bias
    assert y.shape == (B, NUM_CLASSES)
    assert jnp.allclose(y, y_ref, atol=1e-4, rtol=1e-4)

    # Optional bf16 feature transfer (halves the dominant HBM read; f32 accumulate in-kernel).
    y_bf16 = resnet_head_forward(features, w_padded, b_padded,
                                 num_classes=NUM_CLASSES, feature_dtype=jnp.bfloat16)
    jax.block_until_ready(y_bf16)
    assert y_bf16.shape == (B, NUM_CLASSES)
    assert jnp.allclose(y_bf16, y_ref, atol=5e-2, rtol=5e-2)

    print("KERNEL_OK")
</pallas_src>

<mosaic_0001>
module attributes {stable_mosaic.version = 11 : i64} {
  func.func @_head_kernel(%arg0: memref<2x49x512xf32, #tpu.memory_space<vmem>>, %arg1: memref<512x128xf32, #tpu.memory_space<vmem>>, %arg2: memref<1x128xf32, #tpu.memory_space<vmem>>, %arg3: memref<2x128xf32, #tpu.memory_space<vmem>>) attributes {dimension_semantics = [], scalar_prefetch = 0 : i64, scratch_operands = 0 : i64, tpu.core_type = #tpu.core_type<tc>} {
    %c0 = arith.constant 0 : index
    %c0_0 = arith.constant 0 : index
    %c0_1 = arith.constant 0 : index
    %0 = vector.load %arg0[%c0, %c0_0, %c0_1] : memref<2x49x512xf32, #tpu.memory_space<vmem>>, vector<2x49x512xf32>
    %cst = arith.constant dense<0.000000e+00> : vector<2x512xf32>
    %1 = vector.multi_reduction <add>, %0, %cst [1] : vector<2x49x512xf32> to vector<2x512xf32>
    %c0_2 = arith.constant 0 : index
    %c0_3 = arith.constant 0 : index
    %2 = vector.load %arg1[%c0_2, %c0_3] : memref<512x128xf32, #tpu.memory_space<vmem>>, vector<512x128xf32>
    %cst_4 = arith.constant dense<0.000000e+00> : vector<2x128xf32>
    %3 = tpu.matmul %1, %2, %cst_4 {dimension_numbers = #tpu.dot_dimension_numbers<[1], [0], [0], [1], [0, 0, 1, 1], [], []>} : vector<2x512xf32>, vector<512x128xf32>, vector<2x128xf32> -> vector<2x128xf32>
    %c0_5 = arith.constant 0 : index
    %c0_6 = arith.constant 0 : index
    %4 = vector.load %arg2[%c0_5, %c0_6] : memref<1x128xf32, #tpu.memory_space<vmem>>, vector<1x128xf32>
    %5 = vector.broadcast %4 : vector<1x128xf32> to vector<2x128xf32>
    %6 = arith.addf %3, %5 : vector<2x128xf32>
    %c0_7 = arith.constant 0 : index
    %c0_8 = arith.constant 0 : index
    %7 = vector.load %arg3[%c0_7, %c0_8] : memref<2x128xf32, #tpu.memory_space<vmem>>, vector<2x128xf32>
    tpu.vector_store %arg3[%c0_7, %c0_8], %6 {strides = array<i32>} : memref<2x128xf32, #tpu.memory_space<vmem>>, vector<2x128xf32>,
    return
  }
}

</mosaic_0001>

<llo_original>
// kernel: tpu_custom_call.1
$region0: #{tpu_custom_call.1}
  #allocation0 [shape = 'u32[]', space=smem, size = 0x4, offset = 0x4, fixed_abs, tag = 'smem constant byte address 0x4 - core index']
  #allocation1 [shape = 'u32[144,128]{1,0:T(1,128)}', space=vmem, size = 0x12000, scoped, tag = 'internal scratch']
  %s0 = inlined_call_operand.vmem [shape: f32[2,49,512], index: 0, kind: input, shape index: {}]
  %s1 = inlined_call_operand.vmem [shape: f32[512,128], index: 1, kind: input, shape index: {}]
  %s2 = inlined_call_operand.vmem [shape: f32[1,128], index: 2, kind: input, shape index: {}]
  %s3 = inlined_call_operand.hbm [shape: f32[2,128], index: 3, kind: output, shape index: {}]
  %s4 = sld [smem:[#allocation0]]
  $region22: #{tpu_custom_call.1} parent=0
    _
  %s6 = ssub.s32 1, %s4
  %s7 = scalar_select 0, %s6, %s4
  $region1: #{tpu_custom_call.1} parent=0
    #allocation2 [shape = 'u8[1024]{0}', space=vmem, size = 0x400, scoped, tag = 'output window, operand 0, single buffered']
    #allocation3 [shape = 's32[1]{0}', space=sflag, size = 0x4, scoped, tag = 'scoped memory for tpu_custom_call.1']
    %8 = vsyncpa [#allocation3], 0
    // Predicated region
    $region2: #{tpu_custom_call.1} parent=1 // pred_check
      _
    $region3: #{tpu_custom_call.1} parent=1 // pred_check_branch
      %10 = sbr.rel (0) target = $region5
    $region4: #{tpu_custom_call.1} parent=1 // pred_region
      _
    $region5: #{tpu_custom_call.1} parent=1 // pred_fallthru
      _
    // Predicated region
    $region6: #{tpu_custom_call.1} parent=1 // pred_check
      _
    $region7: #{tpu_custom_call.1} parent=1 // pred_check_branch
      %12 = sbr.rel (0) target = $region9
    $region8: #{tpu_custom_call.1} parent=1 // pred_region
      _
    $region9: #{tpu_custom_call.1} parent=1 // pred_fallthru
      _
    // Predicated region
    $region10: #{tpu_custom_call.1} parent=1 // pred_check
      _
    $region11: #{tpu_custom_call.1} parent=1 // pred_check_branch
      %14 = sbr.rel (0) target = $region13
    $region12: #{tpu_custom_call.1} parent=1 // pred_region
      _
    $region13: #{tpu_custom_call.1} parent=1 // pred_fallthru
      _
    %v15 = vld [vmem:[%s0] sm:$0xff]
    %v16 = vld [vmem:[%s0 + $0x8] sm:$0xff]
    %v17 = vld [vmem:[%s0 + $0x10] sm:$0xff]
    %v18 = vld [vmem:[%s0 + $0x18] sm:$0xff]
    %v19 = vld [vmem:[%s0 + $0x20] sm:$0xff]
    %v20 = vld [vmem:[%s0 + $0x28] sm:$0xff]
    %v21 = vld [vmem:[%s0 + $0x30] sm:$0xff]
    %v22 = vld [vmem:[%s0 + $0x38] sm:$0xff]
    %v23 = vld [vmem:[%s0 + $0x40] sm:$0xff]
    %v24 = vld [vmem:[%s0 + $0x48] sm:$0xff]
    %v25 = vld [vmem:[%s0 + $0x50] sm:$0xff]
    %v26 = vld [vmem:[%s0 + $0x58] sm:$0xff]
    %v27 = vld [vmem:[%s0 + $0x60] sm:$0xff]
    %v28 = vld [vmem:[%s0 + $0x68] sm:$0xff]
    %v29 = vld [vmem:[%s0 + $0x70] sm:$0xff]
    %v30 = vld [vmem:[%s0 + $0x78] sm:$0xff]
    %v31 = vld [vmem:[%s0 + $0x80] sm:$0xff]
    %v32 = vld [vmem:[%s0 + $0x88] sm:$0xff]
    %v33 = vld [vmem:[%s0 + $0x90] sm:$0xff]
    %v34 = vld [vmem:[%s0 + $0x98] sm:$0xff]
    %v35 = vld [vmem:[%s0 + $0xa0] sm:$0xff]
    %v36 = vld [vmem:[%s0 + $0xa8] sm:$0xff]
    %v37 = vld [vmem:[%s0 + $0xb0] sm:$0xff]
    %v38 = vld [vmem:[%s0 + $0xb8] sm:$0xff]
    %v39 = vld [vmem:[%s0 + $0xc0] sm:$0x1]
    %v40 = vld [vmem:[%s0 + $0xc8] sm:$0x1]
    %v41 = vld [vmem:[%s0 + $0xd0] sm:$0x1]
    %v42 = vld [vmem:[%s0 + $0xd8] sm:$0x1]
    %v43 = vld [vmem:[%s0 + $0xe0] sm:$0xff]
    %v44 = vld [vmem:[%s0 + $0xe8] sm:$0xff]
    %v45 = vld [vmem:[%s0 + $0xf0] sm:$0xff]
    %v46 = vld [vmem:[%s0 + $0xf8] sm:$0xff]
    %v47 = vld [vmem:[%s0 + $0x100] sm:$0xff]
    %v48 = vld [vmem:[%s0 + $0x108] sm:$0xff]
    %v49 = vld [vmem:[%s0 + $0x110] sm:$0xff]
    %v50 = vld [vmem:[%s0 + $0x118] sm:$0xff]
    %v51 = vld [vmem:[%s0 + $0x120] sm:$0xff]
    %v52 = vld [vmem:[%s0 + $0x128] sm:$0xff]
    %v53 = vld [vmem:[%s0 + $0x130] sm:$0xff]
    %v54 = vld [vmem:[%s0 + $0x138] sm:$0xff]
    %v55 = vld [vmem:[%s0 + $0x140] sm:$0xff]
    %v56 = vld [vmem:[%s0 + $0x148] sm:$0xff]
    %v57 = vld [vmem:[%s0 + $0x150] sm:$0xff]
    %v58 = vld [vmem:[%s0 + $0x158] sm:$0xff]
    %v59 = vld [vmem:[%s0 + $0x160] sm:$0xff]
    %v60 = vld [vmem:[%s0 + $0x168] sm:$0xff]
    %v61 = vld [vmem:[%s0 + $0x170] sm:$0xff]
    %v62 = vld [vmem:[%s0 + $0x178] sm:$0xff]
    %v63 = vld [vmem:[%s0 + $0x180] sm:$0xff]
    %v64 = vld [vmem:[%s0 + $0x188] sm:$0xff]
    %v65 = vld [vmem:[%s0 + $0x190] sm:$0xff]
    %v66 = vld [vmem:[%s0 + $0x198] sm:$0xff]
    %v67 = vld [vmem:[%s0 + $0x1a0] sm:$0x1]
    %v68 = vld [vmem:[%s0 + $0x1a8] sm:$0x1]
    %v69 = vld [vmem:[%s0 + $0x1b0] sm:$0x1]
    %v70 = vld [vmem:[%s0 + $0x1b8] sm:$0x1]
    %v71 = vadd.f32 %v15, %v19
    %v72 = vadd.f32 %v71, %v23
    %v73 = vadd.f32 %v72, %v27
    %v74 = vadd.f32 %v73, %v31
    %v75 = vadd.f32 %v74, %v35
    %vm76 = vcmask 1040384
    %v77 = vsel %vm76, %v39, 0.0
    %v78 = vadd.f32 %v75, %v77
    %v79 = vrot.slane %v78, 4
    %v80 = vadd.f32 %v78, %v79
    %v81 = vrot.slane %v80, 2
    %v82 = vadd.f32 %v80, %v81
    %v83 = vrot.slane %v82, 1
    %v84 = vadd.f32 %v82, %v83
    %v85 = vadd.f32 %v16, %v20
    %v86 = vadd.f32 %v85, %v24
    %v87 = vadd.f32 %v86, %v28
    %v88 = vadd.f32 %v87, %v32
    %v89 = vadd.f32 %v88, %v36
    %v90 = vsel %vm76, %v40, 0.0
    %v91 = vadd.f32 %v89, %v90
    %v92 = vrot.slane %v91, 4
    %v93 = vadd.f32 %v91, %v92
    %v94 = vrot.slane %v93, 2
    %v95 = vadd.f32 %v93, %v94
    %v96 = vrot.slane %v95, 1
    %v97 = vadd.f32 %v95, %v96
    %v98 = vadd.f32 %v17, %v21
    %v99 = vadd.f32 %v98, %v25
    %v100 = vadd.f32 %v99, %v29
    %v101 = vadd.f32 %v100, %v33
    %v102 = vadd.f32 %v101, %v37
    %v103 = vsel %vm76, %v41, 0.0
    %v104 = vadd.f32 %v102, %v103
    %v105 = vrot.slane %v104, 4
    %v106 = vadd.f32 %v104, %v105
    %v107 = vrot.slane %v106, 2
    %v108 = vadd.f32 %v106, %v107
    %v109 = vrot.slane %v108, 1
    %v110 = vadd.f32 %v108, %v109
    %v111 = vadd.f32 %v18, %v22
    %v112 = vadd.f32 %v111, %v26
    %v113 = vadd.f32 %v112, %v30
    %v114 = vadd.f32 %v113, %v34
    %v115 = vadd.f32 %v114, %v38
    %v116 = vsel %vm76, %v42, 0.0
    %v117 = vadd.f32 %v115, %v116
    %v118 = vrot.slane %v117, 4
    %v119 = vadd.f32 %v117, %v118
    %v120 = vrot.slane %v119, 2
    %v121 = vadd.f32 %v119, %v120
    %v122 = vrot.slane %v121, 1
    %v123 = vadd.f32 %v121, %v122
    %v124 = vadd.f32 %v43, %v47
    %v125 = vadd.f32 %v124, %v51
    %v126 = vadd.f32 %v125, %v55
    %v127 = vadd.f32 %v126, %v59
    %v128 = vadd.f32 %v127, %v63
    %v129 = vsel %vm76, %v67, 0.0
    %v130 = vadd.f32 %v128, %v129
    %v131 = vrot.slane %v130, 4
    %v132 = vadd.f32 %v130, %v131
    %v133 = vrot.slane %v132, 2
    %v134 = vadd.f32 %v132, %v133
    %v135 = vrot.slane %v134, 1
    %v136 = vadd.f32 %v134, %v135
    %v137 = vadd.f32 %v44, %v48
    %v138 = vadd.f32 %v137, %v52
    %v139 = vadd.f32 %v138, %v56
    %v140 = vadd.f32 %v139, %v60
    %v141 = vadd.f32 %v140, %v64
    %v142 = vsel %vm76, %v68, 0.0
    %v143 = vadd.f32 %v141, %v142
    %v144 = vrot.slane %v143, 4
    %v145 = vadd.f32 %v143, %v144
    %v146 = vrot.slane %v145, 2
    %v147 = vadd.f32 %v145, %v146
    %v148 = vrot.slane %v147, 1
    %v149 = vadd.f32 %v147, %v148
    %v150 = vadd.f32 %v45, %v49
    %v151 = vadd.f32 %v150, %v53
    %v152 = vadd.f32 %v151, %v57
    %v153 = vadd.f32 %v152, %v61
    %v154 = vadd.f32 %v153, %v65
    %v155 = vsel %vm76, %v69, 0.0
    %v156 = vadd.f32 %v154, %v155
    %v157 = vrot.slane %v156, 4
    %v158 = vadd.f32 %v156, %v157
    %v159 = vrot.slane %v158, 2
    %v160 = vadd.f32 %v158, %v159
    %v161 = vrot.slane %v160, 1
    %v162 = vadd.f32 %v160, %v161
    %v163 = vadd.f32 %v46, %v50
    %v164 = vadd.f32 %v163, %v54
    %v165 = vadd.f32 %v164, %v58
    %v166 = vadd.f32 %v165, %v62
    %v167 = vadd.f32 %v166, %v66
    %v168 = vsel %vm76, %v70, 0.0
    %v169 = vadd.f32 %v167, %v168
    %v170 = vrot.slane %v169, 4
    %v171 = vadd.f32 %v169, %v170
    %v172 = vrot.slane %v171, 2
    %v173 = vadd.f32 %v171, %v172
    %v174 = vrot.slane %v173, 1
    %v175 = vadd.f32 %v173, %v174
    %v176 = vld [vmem:[%s1] sm:$0xff]
    %v177 = vld [vmem:[%s1 + $0x8] sm:$0xff]
    %v178 = vld [vmem:[%s1 + $0x10] sm:$0xff]
    %v179 = vld [vmem:[%s1 + $0x18] sm:$0xff]
    %v180 = vld [vmem:[%s1 + $0x20] sm:$0xff]
    %v181 = vld [vmem:[%s1 + $0x28] sm:$0xff]
    %v182 = vld [vmem:[%s1 + $0x30] sm:$0xff]
    %v183 = vld [vmem:[%s1 + $0x38] sm:$0xff]
    %v184 = vld [vmem:[%s1 + $0x40] sm:$0xff]
    %v185 = vld [vmem:[%s1 + $0x48] sm:$0xff]
    %v186 = vld [vmem:[%s1 + $0x50] sm:$0xff]
    %v187 = vld [vmem:[%s1 + $0x58] sm:$0xff]
    %v188 = vld [vmem:[%s1 + $0x60] sm:$0xff]
    %v189 = vld [vmem:[%s1 + $0x68] sm:$0xff]
    %v190 = vld [vmem:[%s1 + $0x70] sm:$0xff]
    %v191 = vld [vmem:[%s1 + $0x78] sm:$0xff]
    %v192 = vld [vmem:[%s1 + $0x80] sm:$0xff]
    %v193 = vld [vmem:[%s1 + $0x88] sm:$0xff]
    %v194 = vld [vmem:[%s1 + $0x90] sm:$0xff]
    %v195 = vld [vmem:[%s1 + $0x98] sm:$0xff]
    %v196 = vld [vmem:[%s1 + $0xa0] sm:$0xff]
    %v197 = vld [vmem:[%s1 + $0xa8] sm:$0xff]
    %v198 = vld [vmem:[%s1 + $0xb0] sm:$0xff]
    %v199 = vld [vmem:[%s1 + $0xb8] sm:$0xff]
    %v200 = vld [vmem:[%s1 + $0xc0] sm:$0xff]
    %v201 = vld [vmem:[%s1 + $0xc8] sm:$0xff]
    %v202 = vld [vmem:[%s1 + $0xd0] sm:$0xff]
    %v203 = vld [vmem:[%s1 + $0xd8] sm:$0xff]
    %v204 = vld [vmem:[%s1 + $0xe0] sm:$0xff]
    %v205 = vld [vmem:[%s1 + $0xe8] sm:$0xff]
    %v206 = vld [vmem:[%s1 + $0xf0] sm:$0xff]
    %v207 = vld [vmem:[%s1 + $0xf8] sm:$0xff]
    %v208 = vld [vmem:[%s1 + $0x100] sm:$0xff]
    %v209 = vld [vmem:[%s1 + $0x108] sm:$0xff]
    %v210 = vld [vmem:[%s1 + $0x110] sm:$0xff]
    %v211 = vld [vmem:[%s1 + $0x118] sm:$0xff]
    %v212 = vld [vmem:[%s1 + $0x120] sm:$0xff]
    %v213 = vld [vmem:[%s1 + $0x128] sm:$0xff]
    %v214 = vld [vmem:[%s1 + $0x130] sm:$0xff]
    %v215 = vld [vmem:[%s1 + $0x138] sm:$0xff]
    %v216 = vld [vmem:[%s1 + $0x140] sm:$0xff]
    %v217 = vld [vmem:[%s1 + $0x148] sm:$0xff]
    %v218 = vld [vmem:[%s1 + $0x150] sm:$0xff]
    %v219 = vld [vmem:[%s1 + $0x158] sm:$0xff]
    %v220 = vld [vmem:[%s1 + $0x160] sm:$0xff]
    %v221 = vld [vmem:[%s1 + $0x168] sm:$0xff]
    %v222 = vld [vmem:[%s1 + $0x170] sm:$0xff]
    %v223 = vld [vmem:[%s1 + $0x178] sm:$0xff]
    %v224 = vld [vmem:[%s1 + $0x180] sm:$0xff]
    %v225 = vld [vmem:[%s1 + $0x188] sm:$0xff]
    %v226 = vld [vmem:[%s1 + $0x190] sm:$0xff]
    %v227 = vld [vmem:[%s1 + $0x198] sm:$0xff]
    %v228 = vld [vmem:[%s1 + $0x1a0] sm:$0xff]
    %v229 = vld [vmem:[%s1 + $0x1a8] sm:$0xff]
    %v230 = vld [vmem:[%s1 + $0x1b0] sm:$0xff]
    %v231 = vld [vmem:[%s1 + $0x1b8] sm:$0xff]
    %v232 = vld [vmem:[%s1 + $0x1c0] sm:$0xff]
    %v233 = vld [vmem:[%s1 + $0x1c8] sm:$0xff]
    %v234 = vld [vmem:[%s1 + $0x1d0] sm:$0xff]
    %v235 = vld [vmem:[%s1 + $0x1d8] sm:$0xff]
    %v236 = vld [vmem:[%s1 + $0x1e0] sm:$0xff]
    %v237 = vld [vmem:[%s1 + $0x1e8] sm:$0xff]
    %v238 = vld [vmem:[%s1 + $0x1f0] sm:$0xff]
    %v239 = vld [vmem:[%s1 + $0x1f8] sm:$0xff]
    %v240 = vld [vmem:[%s2] sm:$0x1]
    %v242 = vlaneseq
    %v243 = vshrl.u32 %v242, 7
    %v244 = vsub.s32 0, %v243
    %v245 = vrot.slane %v240, %v244
    %vm255 = vcmask 1041409
    %v256 = vsel %vm255, %v136, %v84
    %v257 = vsel %vm255, %v149, %v97
    %v258 = vsel %vm255, %v162, %v110
    %v259 = vsel %vm255, %v175, %v123
    %264 = vmatprep.subr.mxu0 0.0
    %265 = vmatpush1.msra.mxu0 %v176
    %266 = vmatprep.subr.mxu0 0.0
    %267 = vmatpush1.msra.mxu0 %v177
    %268 = vmatprep.subr.mxu0 0.0
    %269 = vmatpush1.msra.mxu0 %v178
    %270 = vmatprep.subr.mxu0 0.0
    %271 = vmatpush1.msra.mxu0 %v179
    %272 = vmatprep.subr.mxu0 0.0
    %273 = vmatpush1.msra.mxu0 %v180
    %274 = vmatprep.subr.mxu0 0.0
    %275 = vmatpush1.msra.mxu0 %v181
    %276 = vmatprep.subr.mxu0 0.0
    %277 = vmatpush1.msra.mxu0 %v182
    %278 = vmatprep.subr.mxu0 0.0
    %279 = vmatpush1.msra.mxu0 %v183
    %280 = vmatprep.subr.mxu0 0.0
    %281 = vmatpush1.msra.mxu0 %v184
    %282 = vmatprep.subr.mxu0 0.0
    %283 = vmatpush1.msra.mxu0 %v185
    %284 = vmatprep.subr.mxu0 0.0
    %285 = vmatpush1.msra.mxu0 %v186
    %286 = vmatprep.subr.mxu0 0.0
    %287 = vmatpush1.msra.mxu0 %v187
    %288 = vmatprep.subr.mxu0 0.0
    %289 = vmatpush1.msra.mxu0 %v188
    %290 = vmatprep.subr.mxu0 0.0
    %291 = vmatpush1.msra.mxu0 %v189
    %292 = vmatprep.subr.mxu0 0.0
    %293 = vmatpush1.msra.mxu0 %v190
    %294 = vmatprep.subr.mxu0 0.0
    %295 = vmatpush1.msra.mxu0 %v191
    %296 = vmatprep.subr.mxu0 0.0
    %297 = vmatpush1.msra.mxu0 %v192
    %298 = vmatprep.subr.mxu0 0.0
    %299 = vmatpush1.msra.mxu0 %v193
    %300 = vmatprep.subr.mxu0 0.0
    %301 = vmatpush1.msra.mxu0 %v194
    %302 = vmatprep.subr.mxu0 0.0
    %303 = vmatpush1.msra.mxu0 %v195
    %304 = vmatprep.subr.mxu0 0.0
    %305 = vmatpush1.msra.mxu0 %v196
    %306 = vmatprep.subr.mxu0 0.0
    %307 = vmatpush1.msra.mxu0 %v197
    %308 = vmatprep.subr.mxu0 0.0
    %309 = vmatpush1.msra.mxu0 %v198
    %310 = vmatprep.subr.mxu0 0.0
    %311 = vmatpush1.msra.mxu0 %v199
    %312 = vmatprep.subr.mxu0 0.0
    %313 = vmatpush1.msra.mxu0 %v200
    %314 = vmatprep.subr.mxu0 0.0
    %315 = vmatpush1.msra.mxu0 %v201
    %316 = vmatprep.subr.mxu0 0.0
    %317 = vmatpush1.msra.mxu0 %v202
    %318 = vmatprep.subr.mxu0 0.0
    %319 = vmatpush1.msra.mxu0 %v203
    %320 = vmatprep.subr.mxu0 0.0
    %321 = vmatpush1.msra.mxu0 %v204
    %322 = vmatprep.subr.mxu0 0.0
    %323 = vmatpush1.msra.mxu0 %v205
    %324 = vmatprep.subr.mxu0 0.0
    %325 = vmatpush1.msra.mxu0 %v206
    %326 = vmatprep.subr.mxu0 0.0
    %327 = vmatpush1.msra.mxu0 %v207
    %328 = vmatprep.mubr.f32.mxu0 %v257
    %329 = vmatmul.mubr.f32.gmra.mrb[0].mxu0 %v256
    %v330 = vpop.f32.mrb[0].mxu0
    %v331 = vadd.f32 %v245, %v330
    %v332 = vpop.f32.mrb[0].mxu0
    %333 = vdwg.mxu0
    %334 = vmatprep.subr.mxu0 0.0
    %335 = vmatpush1.msra.mxu0 %v208
    %336 = vmatprep.subr.mxu0 0.0
    %337 = vmatpush1.msra.mxu0 %v209
    %338 = vmatprep.subr.mxu0 0.0
    %339 = vmatpush1.msra.mxu0 %v210
    %340 = vmatprep.subr.mxu0 0.0
    %341 = vmatpush1.msra.mxu0 %v211
    %342 = vmatprep.subr.mxu0 0.0
    %343 = vmatpush1.msra.mxu0 %v212
    %344 = vmatprep.subr.mxu0 0.0
    %345 = vmatpush1.msra.mxu0 %v213
    %346 = vmatprep.subr.mxu0 0.0
    %347 = vmatpush1.msra.mxu0 %v214
    %348 = vmatprep.subr.mxu0 0.0
    %349 = vmatpush1.msra.mxu0 %v215
    %350 = vmatprep.subr.mxu0 0.0
    %351 = vmatpush1.msra.mxu0 %v216
    %352 = vmatprep.subr.mxu0 0.0
    %353 = vmatpush1.msra.mxu0 %v217
    %354 = vmatprep.subr.mxu0 0.0
    %355 = vmatpush1.msra.mxu0 %v218
    %356 = vmatprep.subr.mxu0 0.0
    %357 = vmatpush1.msra.mxu0 %v219
    %358 = vmatprep.subr.mxu0 0.0
    %359 = vmatpush1.msra.mxu0 %v220
    %360 = vmatprep.subr.mxu0 0.0
    %361 = vmatpush1.msra.mxu0 %v221
    %362 = vmatprep.subr.mxu0 0.0
    %363 = vmatpush1.msra.mxu0 %v222
    %364 = vmatprep.subr.mxu0 0.0
    %365 = vmatpush1.msra.mxu0 %v223
    %366 = vmatprep.subr.mxu0 0.0
    %367 = vmatpush1.msra.mxu0 %v224
    %368 = vmatprep.subr.mxu0 0.0
    %369 = vmatpush1.msra.mxu0 %v225
    %370 = vmatprep.subr.mxu0 0.0
    %371 = vmatpush1.msra.mxu0 %v226
    %372 = vmatprep.subr.mxu0 0.0
    %373 = vmatpush1.msra.mxu0 %v227
    %374 = vmatprep.subr.mxu0 0.0
    %375 = vmatpush1.msra.mxu0 %v228
    %376 = vmatprep.subr.mxu0 0.0
    %377 = vmatpush1.msra.mxu0 %v229
    %378 = vmatprep.subr.mxu0 0.0
    %379 = vmatpush1.msra.mxu0 %v230
    %380 = vmatprep.subr.mxu0 0.0
    %381 = vmatpush1.msra.mxu0 %v231
    %382 = vmatprep.subr.mxu0 0.0
    %383 = vmatpush1.msra.mxu0 %v232
    %384 = vmatprep.subr.mxu0 0.0
    %385 = vmatpush1.msra.mxu0 %v233
    %386 = vmatprep.subr.mxu0 0.0
    %387 = vmatpush1.msra.mxu0 %v234
    %388 = vmatprep.subr.mxu0 0.0
    %389 = vmatpush1.msra.mxu0 %v235
    %390 = vmatprep.subr.mxu0 0.0
    %391 = vmatpush1.msra.mxu0 %v236
    %392 = vmatprep.subr.mxu0 0.0
    %393 = vmatpush1.msra.mxu0 %v237
    %394 = vmatprep.subr.mxu0 0.0
    %395 = vmatpush1.msra.mxu0 %v238
    %396 = vmatprep.subr.mxu0 0.0
    %397 = vmatpush1.msra.mxu0 %v239
    %398 = vmatprep.mubr.f32.mxu0 %v259
    %399 = vmatmul.mubr.f32.gmra.mrb[0].mxu0 %v258
    %v400 = vpop.f32.mrb[0].mxu0
    %v401 = vadd.f32 %v331, %v400
    %v402 = vpop.f32.mrb[0].mxu0
    %403 = vdwg.mxu0
    %404 = vst [vmem:[#allocation2] sm:$0x3] %v401
    // Predicated region
    $region14: #{tpu_custom_call.1} parent=1 // pred_check
      _
    $region15: #{tpu_custom_call.1} parent=1 // pred_check_branch
      %406 = sbr.rel (0) target = $region17
    $region16: #{tpu_custom_call.1} parent=1 // pred_region
      %s408 = ssub.s32 32, 32
      %409 = vsyncadd [#allocation3], %s408
      %s411 = sshll.u32 [#allocation2], 4
      %s412 = int_to_ptr.vmem [resolvable:$true] %s411
      %414 = dma.vmem_to_hbm [thread:$0]  %s412, 32, %s3, [#allocation3]
    $region17: #{tpu_custom_call.1} parent=1 // pred_fallthru
      _
    // Predicated region
    $region18: #{tpu_custom_call.1} parent=1 // pred_check
      _
    $region19: #{tpu_custom_call.1} parent=1 // pred_check_branch
      %416 = sbr.rel (0) target = $region21
    $region20: #{tpu_custom_call.1} parent=1 // pred_region
      %417 = dma.done [#allocation3], 32
    $region21: #{tpu_custom_call.1} parent=1 // pred_fallthru
      _
    %418 = vsyncpa [#allocation3], 1

</llo_original>
